<compile_context>
chip_gen: v7x
topology: tpu7x:2x2x1
jax: 0.10.0
libtpu: 0.0.40
codegen_flags: <defaults>
</compile_context>

<pallas_src>
import jax
import jax.numpy as jnp
from jax.experimental import pallas as pl
from jax.experimental.pallas import tpu as pltpu


# ----------------------------- kernels -----------------------------

def _nlinear_kernel(x_ref, w_ref, b_ref, o_ref):
    # x_ref: (TB, Nb*Fin)   w_ref: (1, Nb*Fin, Nb*Fout)  (pre-packed block-diagonal)
    # b_ref: (1, Nb*Fout)   o_ref: (TB, Nb*Fout)
    acc = jnp.dot(x_ref[...], w_ref[0], preferred_element_type=jnp.float32)
    o_ref[...] = (acc + b_ref[...].astype(jnp.float32)).astype(o_ref.dtype)


def _nlinear_ktiled_kernel(x_ref, w_ref, b_ref, o_ref, acc_ref):
    # grid = (layers, batch-tiles, k-tiles); K (Fin) innermost reduction axis.
    # x_ref: (TB, TK)  w_ref: (1, TK, Fout)  b_ref: (1, Fout)  o_ref: (TB, Fout)
    kk = pl.program_id(2)

    @pl.when(kk == 0)
    def _():
        acc_ref[...] = jnp.zeros_like(acc_ref)

    acc_ref[...] += jnp.dot(x_ref[...], w_ref[0], preferred_element_type=jnp.float32)

    @pl.when(kk == pl.num_programs(2) - 1)
    def _():
        o_ref[...] = (acc_ref[...] + b_ref[...].astype(jnp.float32)).astype(o_ref.dtype)


# ----------------------------- helpers -----------------------------

def _round_up(v, m):
    return (v + m - 1) // m * m


def _hw_info():
    """Returns (vmem_capacity_bytes, vmem_limit_bytes, mxu_lane_target)."""
    kind = ""
    try:
        kind = jax.devices()[0].device_kind.lower()
    except Exception:
        pass
    vmem_cap = None
    try:
        vmem_cap = int(pltpu.get_tpu_info().vmem_capacity_bytes)
    except Exception:
        vmem_cap = None
    is_v5e = ("v5e" in kind) or ("v5 lite" in kind) or ("v5lite" in kind)
    is_v7 = "v7" in kind
    if vmem_cap is None:
        vmem_cap = (64 << 20) if is_v7 else (128 << 20)
    # v5e MXU is 128-wide; v6e/v7x are 2x256x256 (padding K/N up to 256 is free there).
    lane_target = 128 if is_v5e else 256
    # Scoped VMEM budget for the kernel, leaving headroom for compiler-internal scratch.
    if is_v7 or vmem_cap <= (64 << 20):
        vmem_limit = min(44 << 20, int(0.68 * vmem_cap))
    else:
        vmem_limit = min(64 << 20, int(0.50 * vmem_cap))
    return vmem_cap, vmem_limit, lane_target


def _choose_block_n(n, fin, fout, isz_w, lane_target, weight_cap_bytes):
    """Smallest Nb (divisor of N) giving lane-dense flattened blocks whose
    double-buffered packed weight fits the cap; None -> caller pads features instead."""
    divisors = [d for d in range(1, n + 1) if n % d == 0]

    def layout_ok(d):
        return d == n or ((d * fin) % 128 == 0 and (d * fout) % 128 == 0)

    def cap_ok(d):
        return 2 * (d * fin) * (d * fout) * isz_w <= weight_cap_bytes

    cands = [d for d in divisors if layout_ok(d) and cap_ok(d)]
    if not cands:
        return None
    dense = [d for d in cands if d * fin >= lane_target and d * fout >= lane_target]
    return min(dense) if dense else max(cands)


def _choose_block_b(b, sublane_mult, budget_bytes, per_tb_bytes, max_tb=2048):
    """Largest batch tile (divisor of B, multiple of the dtype's sublane packing,
    capped at max_tb) whose double-buffered footprint fits budget_bytes."""
    divisors = [d for d in range(1, b + 1) if b % d == 0]
    cands = [d for d in divisors if d % sublane_mult == 0 and d <= max_tb]
    if b <= max_tb:
        cands.append(b)  # full batch is always a legal block (block == full dim)
    if not cands:
        cands = [b]
    cands = sorted(set(cands), reverse=True)
    for tb in cands:
        if per_tb_bytes(tb) <= budget_bytes:
            return tb
    return cands[-1]


def _pack_block_diag(weight, nb):
    """(N, Fin, Fout) -> (N//nb, nb*Fin, nb*Fout) block-diagonal. Done once, in HBM."""
    n, fin, fout = weight.shape
    g = n // nb
    if nb == 1:
        return weight
    w = weight.reshape(g, nb, fin, fout)
    eye = jnp.eye(nb, dtype=weight.dtype)
    packed = jnp.einsum("ij,giab->giajb", eye, w)
    return packed.reshape(g, nb * fin, nb * fout)


# ----------------------------- wrapper -----------------------------

def nlinear(x, weight, bias=None, *, block_n=None, block_b=None, block_k=None):
    """x: (B, N, Fin), weight: (N, Fin, Fout), bias: (N, Fout) -> (B, N, Fout)."""
    B, N, Fin = x.shape
    Nw, Fin_w, Fout = weight.shape
    assert N == Nw and Fin == Fin_w
    if bias is None:
        bias = jnp.zeros((N, Fout), dtype=weight.dtype)
    assert bias.shape == (N, Fout)

    isz_x = jnp.dtype(x.dtype).itemsize
    isz_w = jnp.dtype(weight.dtype).itemsize
    sublane_mult = max(8, 32 // isz_x)            # f32: 8, bf16: 16, 8-bit: 32

    vmem_cap, vmem_limit, lane_target = _hw_info()
    budget = int(0.75 * vmem_limit)               # footprint target for tile selection
    weight_cap = int(0.40 * vmem_limit)           # resident (double-buffered) weight block

    # ---- how many layers (Nb) to pack per grid step ----
    Fin_p, Fout_p = Fin, Fout
    if block_n is not None:
        nb = block_n
    else:
        nb = _choose_block_n(N, Fin, Fout, isz_w, lane_target, weight_cap)
        if nb is None:
            # No aligned divisor fits the cap: pad features to lane alignment, one
            # layer per block (K-tiled below if the per-layer weight is still too big).
            nb = 1
            Fin_p = _round_up(Fin, 128)
            Fout_p = _round_up(Fout, 128)
    assert N % nb == 0
    assert nb == N or ((nb * Fin_p) % 128 == 0 and (nb * Fout_p) % 128 == 0), (
        "block_n must make nb*Fin and nb*Fout multiples of 128 (or nb == N)")
    g_n = N // nb

    # ---- feature padding (only if required; padded cols sliced off at the end) ----
    if Fin_p != Fin:
        x = jnp.pad(x, ((0, 0), (0, 0), (0, Fin_p - Fin)))
        weight = jnp.pad(weight, ((0, 0), (0, Fin_p - Fin), (0, 0)))
    if Fout_p != Fout:
        weight = jnp.pad(weight, ((0, 0), (0, 0), (0, Fout_p - Fout)))
        bias = jnp.pad(bias, ((0, 0), (0, Fout_p - Fout)))

    # Free row-major reshapes (pure metadata, no HBM transpose traffic).
    x2 = x.reshape(B, N * Fin_p)
    b2 = bias.reshape(1, N * Fout_p)

    # ---- does the per-block weight need a K (Fin) reduction axis? ----
    use_k = (block_k is not None) or (
        nb == 1 and 2 * Fin_p * Fout_p * isz_w > weight_cap
        and Fin_p % 128 == 0 and Fin_p > 128)
    if use_k:
        assert nb == 1, "K-tiling is only used with one layer per block"
        if block_k is not None:
            tk = block_k
        else:
            tk = 128
            d = Fin_p // 128
            for m in range(d, 0, -1):   # largest multiple-of-128 divisor of Fin_p that fits
                if d % m == 0 and 2 * (m * 128) * Fout_p * isz_w <= weight_cap:
                    tk = m * 128
                    break
        assert Fin_p % tk == 0 and tk % 128 == 0
        g_k = Fin_p // tk
        fixed = 2 * tk * Fout_p * isz_w + 2 * Fout_p * isz_w
        per_tb = lambda tb: (fixed + 2 * tb * tk * isz_x
                             + 2 * tb * Fout_p * isz_x + tb * Fout_p * 4)
    else:
        tk = g_k = None
        fixed = 2 * (nb * Fin_p) * (nb * Fout_p) * isz_w + 2 * nb * Fout_p * isz_w
        per_tb = lambda tb: (fixed + 2 * tb * nb * Fin_p * isz_x
                             + 2 * tb * nb * Fout_p * isz_x)

    # ---- footprint-aware batch tile ----
    tb = block_b if block_b is not None else _choose_block_b(B, sublane_mult, budget, per_tb)
    assert B % tb == 0
    g_b = B // tb
    # Make sure the scoped VMEM limit actually covers the chosen footprint.
    vmem_limit = min(int(0.9 * vmem_cap), max(vmem_limit, per_tb(tb) + (4 << 20)))

    # ---- advisory cost estimate for XLA scheduling around the custom call ----
    if use_k:
        w_hbm_bytes = N * Fin_p * Fout_p * isz_w * g_b   # weight re-read per batch tile
    else:
        w_hbm_bytes = g_n * (nb * Fin_p) * (nb * Fout_p) * isz_w
    cost = pl.CostEstimate(
        flops=int(2 * B * N * Fin_p * Fout_p),
        transcendentals=0,
        bytes_accessed=int(x2.size * isz_x + b2.size * isz_w
                           + B * N * Fout_p * isz_x + w_hbm_bytes),
    )

    if not use_k:
        # Pre-packed block-diagonal weights: one DMA + one MXU matmul per step.
        wp = _pack_block_diag(weight, nb)        # (g_n, nb*Fin_p, nb*Fout_p)
        out2 = pl.pallas_call(
            _nlinear_kernel,
            out_shape=jax.ShapeDtypeStruct((B, N * Fout_p), x.dtype),
            grid_spec=pltpu.PrefetchScalarGridSpec(
                num_scalar_prefetch=0,
                # batch tiles innermost: each packed weight block is DMA'd once and
                # stays resident across all batch tiles of that n-block.
                grid=(g_n, g_b),
                in_specs=[
                    pl.BlockSpec((tb, nb * Fin_p), lambda g, ib: (ib, g)),
                    pl.BlockSpec((1, nb * Fin_p, nb * Fout_p), lambda g, ib: (g, 0, 0)),
                    pl.BlockSpec((1, nb * Fout_p), lambda g, ib: (0, g)),
                ],
                out_specs=pl.BlockSpec((tb, nb * Fout_p), lambda g, ib: (ib, g)),
            ),
            compiler_params=pltpu.CompilerParams(
                dimension_semantics=("parallel", "parallel"),
                vmem_limit_bytes=vmem_limit,
            ),
            cost_estimate=cost,
        )(x2, wp, b2)
    else:
        kdiv = Fin_p // tk
        out2 = pl.pallas_call(
            _nlinear_ktiled_kernel,
            out_shape=jax.ShapeDtypeStruct((B, N * Fout_p), x.dtype),
            grid_spec=pltpu.PrefetchScalarGridSpec(
                num_scalar_prefetch=0,
                grid=(g_n, g_b, g_k),            # g_n == N here (nb == 1), K innermost
                in_specs=[
                    pl.BlockSpec((tb, tk), lambda g, ib, kk: (ib, g * kdiv + kk)),
                    pl.BlockSpec((1, tk, Fout_p), lambda g, ib, kk: (g, kk, 0)),
                    pl.BlockSpec((1, Fout_p), lambda g, ib, kk: (0, g)),
                ],
                out_specs=pl.BlockSpec((tb, Fout_p), lambda g, ib, kk: (ib, g)),
                scratch_shapes=[pltpu.VMEM((tb, Fout_p), jnp.float32)],
            ),
            compiler_params=pltpu.CompilerParams(
                dimension_semantics=("parallel", "parallel", "arbitrary"),
                vmem_limit_bytes=vmem_limit,
            ),
            cost_estimate=cost,
        )(x2, weight, b2)

    out = out2.reshape(B, N, Fout_p)             # free reshape back to (B, N, Fout_p)
    if Fout_p != Fout:
        out = out[..., :Fout]
    return out


def init_nlinear_params(key, n, in_features, out_features, dtype=jnp.float32):
    """Matches init_rsqrt_uniform_: U(-1/sqrt(in_features), 1/sqrt(in_features))."""
    d_rsqrt = in_features ** (-0.5)
    kw, kb = jax.random.split(key)
    weight = jax.random.uniform(kw, (n, in_features, out_features), dtype=dtype,
                                minval=-d_rsqrt, maxval=d_rsqrt)
    bias = jax.random.uniform(kb, (n, out_features), dtype=dtype,
                              minval=-d_rsqrt, maxval=d_rsqrt)
    return weight, bias


if __name__ == "__main__":
    root = jax.random.PRNGKey(0)

    def bf16_exact(a):
        # Snap values to bf16-representable floats so the numeric check is robust to
        # the TPU matmul precision mode (products are then exact in f32).
        return a.astype(jnp.bfloat16).astype(jnp.float32)

    def ref_nlinear(x, w, b):
        out = jnp.einsum("bnf,nfo->bno", x, w)
        return out if b is None else out + b[None, :, :]

    def check(out, ref, tag):
        assert out.shape == ref.shape, (tag, out.shape, ref.shape)
        assert jnp.allclose(out, ref, atol=1e-4, rtol=1e-4), tag

    # 1) primary small config -> pre-packed block-diagonal path (nb = N = 4, lane-dense)
    k0, k1, k2 = jax.random.split(root, 3)
    B, N, Fin, Fout = 8, 4, 32, 16
    x = bf16_exact(jax.random.normal(k0, (B, N, Fin), dtype=jnp.float32))
    w, b = init_nlinear_params(k1, N, Fin, Fout)
    w = bf16_exact(w)
    out = jax.block_until_ready(nlinear(x, w, b))
    check(out, ref_nlinear(x, w, b), "packed")

    # 2) ragged shapes + no bias -> full-extent (nb = N) blocks
    ka, kb_ = jax.random.split(k2)
    B2, N2, F2i, F2o = 4, 3, 5, 7
    x2 = bf16_exact(jax.random.normal(ka, (B2, N2, F2i), dtype=jnp.float32))
    w2, _ = init_nlinear_params(kb_, N2, F2i, F2o)
    w2 = bf16_exact(w2)
    out2 = jax.block_until_ready(nlinear(x2, w2, None))
    check(out2, ref_nlinear(x2, w2, None), "ragged")

    # 3) explicit K-tiled reduction path (small, but exercises the f32 accumulator)
    kc, kd = jax.random.split(ka)
    B3, N3, F3i, F3o = 16, 2, 256, 128
    x3 = bf16_exact(jax.random.normal(kc, (B3, N3, F3i), dtype=jnp.float32))
    w3, b3 = init_nlinear_params(kd, N3, F3i, F3o)
    w3 = bf16_exact(w3)
    out3 = jax.block_until_ready(nlinear(x3, w3, b3, block_n=1, block_k=128))
    check(out3, ref_nlinear(x3, w3, b3), "ktiled")

    print("KERNEL_OK")
</pallas_src>

<mosaic_0001>
module attributes {stable_mosaic.version = 11 : i64} {
  func.func @_nlinear_kernel(%arg0: i32, %arg1: i32, %arg2: memref<8x128xf32, #tpu.memory_space<vmem>>, %arg3: memref<1x128x64xf32, #tpu.memory_space<vmem>>, %arg4: memref<1x64xf32, #tpu.memory_space<vmem>>, %arg5: memref<8x64xf32, #tpu.memory_space<vmem>>) attributes {dimension_semantics = [#tpu.dimension_semantics<parallel>, #tpu.dimension_semantics<parallel>], iteration_bounds = array<i64: 1, 1>, scalar_prefetch = 0 : i64, scratch_operands = 0 : i64, tpu.core_type = #tpu.core_type<tc>, window_params = [{transform_indices = @transform_0, window_bounds = array<i64: 8, 128>}, {transform_indices = @transform_1, window_bounds = array<i64: 1, 128, 64>}, {transform_indices = @transform_2, window_bounds = array<i64: 1, 64>}, {transform_indices = @transform_3, window_bounds = array<i64: 8, 64>}]} {
    %c0 = arith.constant 0 : index
    %c0_0 = arith.constant 0 : index
    %0 = vector.load %arg2[%c0, %c0_0] : memref<8x128xf32, #tpu.memory_space<vmem>>, vector<8x128xf32>
    %c0_1 = arith.constant 0 : index
    %c0_2 = arith.constant 0 : index
    %c0_3 = arith.constant 0 : index
    %1 = vector.load %arg3[%c0_1, %c0_2, %c0_3] : memref<1x128x64xf32, #tpu.memory_space<vmem>>, vector<1x128x64xf32>
    %2 = vector.shape_cast %1 : vector<1x128x64xf32> to vector<128x64xf32>
    %cst = arith.constant dense<0.000000e+00> : vector<8x64xf32>
    %3 = tpu.matmul %0, %2, %cst {dimension_numbers = #tpu.dot_dimension_numbers<[1], [0], [0], [1], [0, 0, 1, 1], [], []>} : vector<8x128xf32>, vector<128x64xf32>, vector<8x64xf32> -> vector<8x64xf32>
    %c0_4 = arith.constant 0 : index
    %c0_5 = arith.constant 0 : index
    %4 = vector.load %arg4[%c0_4, %c0_5] : memref<1x64xf32, #tpu.memory_space<vmem>>, vector<1x64xf32>
    %5 = vector.broadcast %4 : vector<1x64xf32> to vector<8x64xf32>
    %6 = arith.addf %3, %5 : vector<8x64xf32>
    %c0_6 = arith.constant 0 : index
    %c0_7 = arith.constant 0 : index
    %7 = vector.load %arg5[%c0_6, %c0_7] : memref<8x64xf32, #tpu.memory_space<vmem>>, vector<8x64xf32>
    tpu.vector_store %arg5[%c0_6, %c0_7], %6 {strides = array<i32>} : memref<8x64xf32, #tpu.memory_space<vmem>>, vector<8x64xf32>,
    return
  }
  func.func @transform_0(%arg0: i32, %arg1: i32) -> (i32, i32) {
    %c0_i32 = arith.constant 0 : i32
    return %arg1, %arg0 : i32, i32
  }
  func.func @transform_1(%arg0: i32, %arg1: i32) -> (i32, i32, i32) {
    %c0_i32 = arith.constant 0 : i32
    %c0_i32_0 = arith.constant 0 : i32
    %c0_i32_1 = arith.constant 0 : i32
    return %arg0, %c0_i32, %c0_i32_0 : i32, i32, i32
  }
  func.func @transform_2(%arg0: i32, %arg1: i32) -> (i32, i32) {
    %c0_i32 = arith.constant 0 : i32
    %c0_i32_0 = arith.constant 0 : i32
    return %c0_i32, %arg0 : i32, i32
  }
  func.func @transform_3(%arg0: i32, %arg1: i32) -> (i32, i32) {
    %c0_i32 = arith.constant 0 : i32
    return %arg1, %arg0 : i32, i32
  }
}

</mosaic_0001>

<llo_original>
// kernel: tpu_custom_call.1
$region0: #{tpu_custom_call.1}
  #allocation0 [shape = 'u32[]', space=smem, size = 0x4, offset = 0x4, fixed_abs, tag = 'smem constant byte address 0x4 - core index']
  #allocation1 [shape = 'u32[144,128]{1,0:T(1,128)}', space=vmem, size = 0x12000, scoped, tag = 'internal scratch']
  %s0 = inlined_call_operand.hbm [shape: f32[8,128], index: 0, kind: input, shape index: {}]
  %s1 = inlined_call_operand.hbm [shape: f32[1,128,64], index: 1, kind: input, shape index: {}]
  %s2 = inlined_call_operand.hbm [shape: f32[1,64], index: 2, kind: input, shape index: {}]
  %s3 = inlined_call_operand.hbm [shape: f32[8,64], index: 3, kind: output, shape index: {}]
  %s4 = sld [smem:[#allocation0]]
  $region34: #{tpu_custom_call.1} parent=0
    _
  %s6 = ssub.s32 1, %s4
  %s7 = scalar_select 0, %s6, %s4
  $region1: #{tpu_custom_call.1} parent=0
    #allocation2 [shape = 'u8[4096]{0}', space=vmem, size = 0x1000, scoped, tag = 'input window, operand 0, single buffered']
    #allocation3 [shape = 's32[1]{0}', space=sflag, size = 0x4, scoped, tag = 'scoped memory for tpu_custom_call.1']
    #allocation4 [shape = 's32[1]{0}', space=sflag, size = 0x4, scoped, tag = 'scoped memory for tpu_custom_call.1']
    #allocation5 [shape = 'u8[65536]{0}', space=vmem, size = 0x10000, scoped, tag = 'input window, operand 1, single buffered']
    #allocation6 [shape = 's32[1]{0}', space=sflag, size = 0x4, scoped, tag = 'scoped memory for tpu_custom_call.1']
    #allocation7 [shape = 'u8[512]{0}', space=vmem, size = 0x400, scoped, tag = 'input window, operand 2, single buffered']
    #allocation8 [shape = 'u8[4096]{0}', space=vmem, size = 0x1000, scoped, tag = 'output window, operand 0, single buffered']
    %8 = vsyncpa [#allocation3], 0
    %9 = vsyncpa [#allocation6], 0
    %10 = vsyncpa [#allocation4], 0
    // Predicated region
    $region2: #{tpu_custom_call.1} parent=1 // pred_check
      _
    $region3: #{tpu_custom_call.1} parent=1 // pred_check_branch
      %12 = sbr.rel (0) target = $region5
    $region4: #{tpu_custom_call.1} parent=1 // pred_region
      %s14 = ssub.s32 128, 128
      %15 = vsyncadd [#allocation3], %s14
      %s17 = sshll.u32 [#allocation2], 4
      %s18 = int_to_ptr.vmem [resolvable:$true] %s17
      %20 = dma.hbm_to_vmem [thread:$0]  %s0, 128, %s18, [#allocation3]
    $region5: #{tpu_custom_call.1} parent=1 // pred_fallthru
      _
    // Predicated region
    $region6: #{tpu_custom_call.1} parent=1 // pred_check
      _
    $region7: #{tpu_custom_call.1} parent=1 // pred_check_branch
      %22 = sbr.rel (0) target = $region9
    $region8: #{tpu_custom_call.1} parent=1 // pred_region
      %s24 = ssub.s32 2048, 2048
      %25 = vsyncadd [#allocation6], %s24
      %s26 = sshll.u32 [#allocation5], 4
      %s27 = int_to_ptr.vmem [resolvable:$true] %s26
      %32 = dma.hbm_to_vmem [thread:$0]  %s1, 2048, %s27, [#allocation6], 128, 128, 8
    $region9: #{tpu_custom_call.1} parent=1 // pred_fallthru
      _
    // Predicated region
    $region10: #{tpu_custom_call.1} parent=1 // pred_check
      _
    $region11: #{tpu_custom_call.1} parent=1 // pred_check_branch
      %34 = sbr.rel (0) target = $region13
    $region12: #{tpu_custom_call.1} parent=1 // pred_region
      %s36 = ssub.s32 16, 16
      %37 = vsyncadd [#allocation6], %s36
      %s39 = sshll.u32 [#allocation7], 4
      %s40 = int_to_ptr.vmem [resolvable:$true] %s39
      %42 = dma.hbm_to_vmem [thread:$0]  %s2, 16, %s40, [#allocation6]
    $region13: #{tpu_custom_call.1} parent=1 // pred_fallthru
      _
    // Predicated region
    $region14: #{tpu_custom_call.1} parent=1 // pred_check
      _
    $region15: #{tpu_custom_call.1} parent=1 // pred_check_branch
      %44 = sbr.rel (0) target = $region17
    $region16: #{tpu_custom_call.1} parent=1 // pred_region
      %45 = dma.done [#allocation3], 128
    $region17: #{tpu_custom_call.1} parent=1 // pred_fallthru
      _
    // Predicated region
    $region18: #{tpu_custom_call.1} parent=1 // pred_check
      _
    $region19: #{tpu_custom_call.1} parent=1 // pred_check_branch
      %47 = sbr.rel (0) target = $region21
    $region20: #{tpu_custom_call.1} parent=1 // pred_region
      %48 = dma.done [#allocation6], 2048
    $region21: #{tpu_custom_call.1} parent=1 // pred_fallthru
      _
    // Predicated region
    $region22: #{tpu_custom_call.1} parent=1 // pred_check
      _
    $region23: #{tpu_custom_call.1} parent=1 // pred_check_branch
      %50 = sbr.rel (0) target = $region25
    $region24: #{tpu_custom_call.1} parent=1 // pred_region
      %51 = dma.done [#allocation6], 16
    $region25: #{tpu_custom_call.1} parent=1 // pred_fallthru
      _
    %v52 = vld [vmem:[#allocation2] sm:$0xff]
    %v53 = vld [vmem:[#allocation5] sm:$0xff]
    %v54 = vld [vmem:[#allocation5 + $0x8] sm:$0xff]
    %v55 = vld [vmem:[#allocation5 + $0x10] sm:$0xff]
    %v56 = vld [vmem:[#allocation5 + $0x18] sm:$0xff]
    %v57 = vld [vmem:[#allocation5 + $0x20] sm:$0xff]
    %v58 = vld [vmem:[#allocation5 + $0x28] sm:$0xff]
    %v59 = vld [vmem:[#allocation5 + $0x30] sm:$0xff]
    %v60 = vld [vmem:[#allocation5 + $0x38] sm:$0xff]
    %v61 = vld [vmem:[#allocation5 + $0x40] sm:$0xff]
    %v62 = vld [vmem:[#allocation5 + $0x48] sm:$0xff]
    %v63 = vld [vmem:[#allocation5 + $0x50] sm:$0xff]
    %v64 = vld [vmem:[#allocation5 + $0x58] sm:$0xff]
    %v65 = vld [vmem:[#allocation5 + $0x60] sm:$0xff]
    %v66 = vld [vmem:[#allocation5 + $0x68] sm:$0xff]
    %v67 = vld [vmem:[#allocation5 + $0x70] sm:$0xff]
    %v68 = vld [vmem:[#allocation5 + $0x78] sm:$0xff]
    %v69 = vld [vmem:[#allocation7] sm:$0x1]
    %v71 = vlaneseq
    %v72 = vshrl.u32 %v71, 7
    %v73 = vsub.s32 0, %v72
    %v74 = vrot.slane %v69, %v73
    %76 = vmatprep.subr.mxu0 0.0
    %77 = vmatpush1.msra.mxu0 %v53
    %78 = vmatprep.subr.mxu0 0.0
    %79 = vmatpush1.msra.mxu0 %v54
    %80 = vmatprep.subr.mxu0 0.0
    %81 = vmatpush1.msra.mxu0 %v55
    %82 = vmatprep.subr.mxu0 0.0
    %83 = vmatpush1.msra.mxu0 %v56
    %84 = vmatprep.subr.mxu0 0.0
    %85 = vmatpush1.msra.mxu0 %v57
    %86 = vmatprep.subr.mxu0 0.0
    %87 = vmatpush1.msra.mxu0 %v58
    %88 = vmatprep.subr.mxu0 0.0
    %89 = vmatpush1.msra.mxu0 %v59
    %90 = vmatprep.subr.mxu0 0.0
    %91 = vmatpush1.msra.mxu0 %v60
    %92 = vmatprep.subr.mxu0 0.0
    %93 = vmatpush1.msra.mxu0 %v61
    %94 = vmatprep.subr.mxu0 0.0
    %95 = vmatpush1.msra.mxu0 %v62
    %96 = vmatprep.subr.mxu0 0.0
    %97 = vmatpush1.msra.mxu0 %v63
    %98 = vmatprep.subr.mxu0 0.0
    %99 = vmatpush1.msra.mxu0 %v64
    %100 = vmatprep.subr.mxu0 0.0
    %101 = vmatpush1.msra.mxu0 %v65
    %102 = vmatprep.subr.mxu0 0.0
    %103 = vmatpush1.msra.mxu0 %v66
    %104 = vmatprep.subr.mxu0 0.0
    %105 = vmatpush1.msra.mxu0 %v67
    %106 = vmatprep.subr.mxu0 0.0
    %107 = vmatpush1.msra.mxu0 %v68
    %108 = vmatprep.subr.mxu0 0.0
    %109 = vmatpush1.msra.mxu0 0.0
    %110 = vmatprep.subr.mxu0 0.0
    %111 = vmatpush1.msra.mxu0 0.0
    %112 = vmatprep.subr.mxu0 0.0
    %113 = vmatpush1.msra.mxu0 0.0
    %114 = vmatprep.subr.mxu0 0.0
    %115 = vmatpush1.msra.mxu0 0.0
    %116 = vmatprep.subr.mxu0 0.0
    %117 = vmatpush1.msra.mxu0 0.0
    %118 = vmatprep.subr.mxu0 0.0
    %119 = vmatpush1.msra.mxu0 0.0
    %120 = vmatprep.subr.mxu0 0.0
    %121 = vmatpush1.msra.mxu0 0.0
    %122 = vmatprep.subr.mxu0 0.0
    %123 = vmatpush1.msra.mxu0 0.0
    %124 = vmatprep.subr.mxu0 0.0
    %125 = vmatpush1.msra.mxu0 0.0
    %126 = vmatprep.subr.mxu0 0.0
    %127 = vmatpush1.msra.mxu0 0.0
    %128 = vmatprep.subr.mxu0 0.0
    %129 = vmatpush1.msra.mxu0 0.0
    %130 = vmatprep.subr.mxu0 0.0
    %131 = vmatpush1.msra.mxu0 0.0
    %132 = vmatprep.subr.mxu0 0.0
    %133 = vmatpush1.msra.mxu0 0.0
    %134 = vmatprep.subr.mxu0 0.0
    %135 = vmatpush1.msra.mxu0 0.0
    %136 = vmatprep.subr.mxu0 0.0
    %137 = vmatpush1.msra.mxu0 0.0
    %138 = vmatprep.subr.mxu0 0.0
    %139 = vmatpush1.msra.mxu0 0.0
    %140 = vmatprep.mubr.f32.mxu0 0.0
    %141 = vmatmul.mubr.f32.gmra.mrb[0].mxu0 %v52
    %v142 = vpop.f32.mrb[0].mxu0
    %v143 = vadd.f32 %v74, %v142
    %v144 = vpop.f32.mrb[0].mxu0
    %145 = vdwg.mxu0
    %vm146 = vcmask 523264
    %147 = vst.msk [vmem:[#allocation8] sm:$0xff] %vm146, %v143
    // Predicated region
    $region26: #{tpu_custom_call.1} parent=1 // pred_check
      _
    $region27: #{tpu_custom_call.1} parent=1 // pred_check_branch
      %149 = sbr.rel (0) target = $region29
    $region28: #{tpu_custom_call.1} parent=1 // pred_region
      %s151 = ssub.s32 128, 128
      %152 = vsyncadd [#allocation4], %s151
      %s154 = sshll.u32 [#allocation8], 4
      %s155 = int_to_ptr.vmem [resolvable:$true] %s154
      %157 = dma.vmem_to_hbm [thread:$0]  %s155, 128, %s3, [#allocation4]
    $region29: #{tpu_custom_call.1} parent=1 // pred_fallthru
      _
    // Predicated region
    $region30: #{tpu_custom_call.1} parent=1 // pred_check
      _
    $region31: #{tpu_custom_call.1} parent=1 // pred_check_branch
      %159 = sbr.rel (0) target = $region33
    $region32: #{tpu_custom_call.1} parent=1 // pred_region
      %160 = dma.done [#allocation4], 128
    $region33: #{tpu_custom_call.1} parent=1 // pred_fallthru
      _
    %161 = vsyncpa [#allocation3], 1
    %162 = vsyncpa [#allocation6], 1
    %163 = vsyncpa [#allocation4], 1

</llo_original>
